<compile_context>
chip_gen: v7x
topology: tpu7x:2x2x1
jax: 0.10.0
libtpu: 0.0.40
codegen_flags: <defaults>
</compile_context>

<pallas_src>
import jax
import jax.numpy as jnp
from jax.experimental import pallas as pl
from jax.experimental.pallas import tpu as pltpu


def _depth_loss_kernel(pred_ref, targ_ref, mask_ref, sum_ref, cnt_ref):
    """Grid = (sample n, pixel-chunk p, row-tile j); j is the reduction axis.

    pred_ref/targ_ref: (1, C, row_tile, 128); mask_ref: (1, 1, row_tile, 128)
    bool; sum_ref/cnt_ref: (1, 1, 1, 1) f32 output blocks resident across j.
    """
    j = pl.program_id(2)

    @pl.when(j == 0)
    def _():
        sum_ref[...] = jnp.zeros_like(sum_ref)
        cnt_ref[...] = jnp.zeros_like(cnt_ref)

    sel = mask_ref[0, 0]                       # (row_tile, 128) bool
    p = pred_ref[0].astype(jnp.float32)        # (C, row_tile, 128)
    t = targ_ref[0].astype(jnp.float32)

    # log(t) - log(p) == log(t / p): one transcendental per element.  Masked /
    # padded pixels are forced to ratio == 1 so log() is finite and they
    # contribute exactly 0 (no extra mask multiply needed).
    ratio = jnp.where(sel, t / p, 1.0)         # mask broadcasts over C
    d = jnp.log(ratio)

    # Per-step reduce: axis 0 (channels) is a cheap vreg add, then a 2-D
    # cross-lane/sublane reduce on the XLU.  Only the (1,1,1,1) accumulator
    # lives in VMEM -- no tile-sized read-modify-write per step.
    sum_ref[...] += jnp.sum(jnp.sum(d * d, axis=0)).reshape(1, 1, 1, 1)
    cnt_ref[...] += jnp.sum(sel.astype(jnp.float32)).reshape(1, 1, 1, 1)


def _round_up(x, m):
    return (x + m - 1) // m * m


def _pick_row_tile(rows, c, itemsize, budget_bytes):
    """Largest multiple-of-32 sublane row count whose per-input tile fits the
    budget.  Budget is capped at 8 MiB so the double-buffered 2-input pipeline
    (~4x tile + mask buffers) always fits v7x's 64 MiB VMEM."""
    budget_bytes = min(budget_bytes, 8 * 1024 * 1024)
    per_row = max(1, c) * 128 * itemsize
    budget_rows = max(32, (budget_bytes // per_row) // 32 * 32)
    return min(budget_rows, _round_up(rows, 32))


def depth_loss(pred, target, masks, *, tile_budget_bytes=4 * 1024 * 1024):
    """pred/target: (N, C, H, W) float (f32 or bf16); masks: (N, H, W) bool.

    Matches DepthLoss.forward: selecting [masks, :] after permute(0,2,3,1)
    yields (num_sel, C) rows, so the mean runs over num_sel * C elements.
    bf16 inputs are supported (upcast to f32 inside the kernel) and halve the
    dominant HBM stream.
    """
    N, C, H, W = pred.shape
    HW = H * W

    rows = pl.cdiv(HW, 128)                    # pixel rows of 128 lanes
    itemsize = pred.dtype.itemsize
    row_tile = _pick_row_tile(rows, C, itemsize, tile_budget_bytes)

    # Second "parallel" axis so v7x's two TensorCores both get work when N==1
    # (harmless no-op split on single-TC v5e/v6e).
    P = 2 if (N == 1 and rows > row_tile) else 1

    rows_pad = _round_up(rows, P * row_tile)
    hw_pad = rows_pad * 128
    chunk_tiles = rows_pad // (P * row_tile)

    pred_f = pred.reshape(N, C, HW)
    targ_f = target.reshape(N, C, HW)
    mask_f = masks.astype(jnp.bool_).reshape(N, HW)     # 1 B/pixel, no f32 pass

    if hw_pad != HW:
        pad = hw_pad - HW
        # Pad pixels carry mask=False; value 1.0 keeps log finite regardless.
        pred_f = jnp.pad(pred_f, ((0, 0), (0, 0), (0, pad)), constant_values=1.0)
        targ_f = jnp.pad(targ_f, ((0, 0), (0, 0), (0, pad)), constant_values=1.0)
        mask_f = jnp.pad(mask_f, ((0, 0), (0, pad)), constant_values=False)

    # Lane-dense layout: lanes = 128 pixels, sublanes = pixel rows.
    pred_r = pred_f.reshape(N, C, rows_pad, 128)
    targ_r = targ_f.reshape(N, C, rows_pad, 128)
    mask_r = mask_f.reshape(N, 1, rows_pad, 128)

    grid = (N, P, chunk_tiles)

    def data_map(n, p, j):
        return (n, 0, p * chunk_tiles + j, 0)

    def out_map(n, p, j):
        return (n, p, 0, 0)

    sum_out, cnt_out = pl.pallas_call(
        _depth_loss_kernel,
        out_shape=(
            jax.ShapeDtypeStruct((N, P, 1, 1), jnp.float32),
            jax.ShapeDtypeStruct((N, P, 1, 1), jnp.float32),
        ),
        grid_spec=pltpu.PrefetchScalarGridSpec(
            num_scalar_prefetch=0,
            grid=grid,
            in_specs=[
                pl.BlockSpec((1, C, row_tile, 128), data_map),
                pl.BlockSpec((1, C, row_tile, 128), data_map),
                pl.BlockSpec((1, 1, row_tile, 128), data_map),
            ],
            out_specs=[
                pl.BlockSpec((1, 1, 1, 1), out_map),
                pl.BlockSpec((1, 1, 1, 1), out_map),
            ],
        ),
        compiler_params=pltpu.CompilerParams(
            dimension_semantics=("parallel", "parallel", "arbitrary"),
            vmem_limit_bytes=48 * 1024 * 1024,
        ),
    )(pred_r, targ_r, mask_r)

    total_sum = jnp.sum(sum_out)
    total_cnt = jnp.sum(cnt_out)
    # NOTE: empty mask -> sqrt(0/0) = NaN, matching torch.mean over an empty
    # selection in the reference module.
    return jnp.sqrt(total_sum / (total_cnt * jnp.float32(C)))


def _ref_depth_loss(pred, target, masks):
    """Pure-JAX reference, same math as the PyTorch module."""
    C = pred.shape[1]
    p = jnp.transpose(pred, (0, 2, 3, 1)).reshape(-1, C)
    t = jnp.transpose(target, (0, 2, 3, 1)).reshape(-1, C)
    m = masks.reshape(-1, 1).astype(jnp.float32)
    sq = jnp.abs(jnp.log(t) - jnp.log(p)) ** 2
    return jnp.sqrt(jnp.sum(sq * m) / (jnp.sum(m) * C))


if __name__ == "__main__":
    key = jax.random.PRNGKey(0)
    k1, k2, k3, k4, k5, k6 = jax.random.split(key, 6)

    # Case 1: canonical small shape (N=2, C=4, 16x16), 128-aligned pixel count.
    N, C, H, W = 2, 4, 16, 16
    pred = jax.random.uniform(k1, (N, C, H, W), jnp.float32, 0.1, 2.0)
    target = jax.random.uniform(k2, (N, C, H, W), jnp.float32, 0.1, 2.0)
    masks = jax.random.uniform(k3, (N, H, W)) > 0.5
    loss = jax.block_until_ready(depth_loss(pred, target, masks))
    ref = _ref_depth_loss(pred, target, masks)
    assert jnp.allclose(loss, ref, rtol=1e-5, atol=1e-6), (loss, ref)

    # Case 2: N=1 with a tiny tile budget -> exercises the 2-way pixel-chunk
    # parallel axis (both TensorCores on v7x) and multi-step reduction.
    N2, C2, H2, W2 = 1, 1, 128, 128
    pred2 = jax.random.uniform(k4, (N2, C2, H2, W2), jnp.float32, 0.1, 2.0)
    target2 = jax.random.uniform(k5, (N2, C2, H2, W2), jnp.float32, 0.1, 2.0)
    masks2 = jax.random.uniform(k6, (N2, H2, W2)) > 0.3
    loss2 = jax.block_until_ready(
        depth_loss(pred2, target2, masks2, tile_budget_bytes=16 * 1024))
    ref2 = _ref_depth_loss(pred2, target2, masks2)
    assert jnp.allclose(loss2, ref2, rtol=1e-5, atol=1e-6), (loss2, ref2)

    # Case 3: non-128-aligned spatial size -> exercises the pixel-padding path.
    k7, k8, k9 = jax.random.split(k6, 3)
    N3, C3, H3, W3 = 2, 3, 10, 10
    pred3 = jax.random.uniform(k7, (N3, C3, H3, W3), jnp.float32, 0.1, 2.0)
    target3 = jax.random.uniform(k8, (N3, C3, H3, W3), jnp.float32, 0.1, 2.0)
    masks3 = jax.random.uniform(k9, (N3, H3, W3)) > 0.5
    loss3 = jax.block_until_ready(depth_loss(pred3, target3, masks3))
    ref3 = _ref_depth_loss(pred3, target3, masks3)
    assert jnp.allclose(loss3, ref3, rtol=1e-5, atol=1e-6), (loss3, ref3)

    print("KERNEL_OK")
</pallas_src>

<mosaic_0001>
module attributes {stable_mosaic.version = 11 : i64} {
  func.func @_depth_loss_kernel(%arg0: i32, %arg1: i32, %arg2: i32, %arg3: memref<1x4x32x128xf32, #tpu.memory_space<vmem>>, %arg4: memref<1x4x32x128xf32, #tpu.memory_space<vmem>>, %arg5: memref<1x1x32x128xi32, #tpu.memory_space<vmem>>, %arg6: memref<1x1x1x1xf32, #tpu.memory_space<vmem>>, %arg7: memref<1x1x1x1xf32, #tpu.memory_space<vmem>>) attributes {dimension_semantics = [#tpu.dimension_semantics<parallel>, #tpu.dimension_semantics<parallel>, #tpu.dimension_semantics<arbitrary>], iteration_bounds = array<i64: 2, 1, 1>, scalar_prefetch = 0 : i64, scratch_operands = 0 : i64, tpu.core_type = #tpu.core_type<tc>, window_params = [{transform_indices = @transform_0, window_bounds = array<i64: 1, 4, 32, 128>}, {transform_indices = @transform_1, window_bounds = array<i64: 1, 4, 32, 128>}, {transform_indices = @transform_2, window_bounds = array<i64: 1, 1, 32, 128>}, {transform_indices = @transform_3, window_bounds = array<i64: 1, 1, 1, 1>}, {transform_indices = @transform_4, window_bounds = array<i64: 1, 1, 1, 1>}]} {
    %c0_i32 = arith.constant 0 : i32
    %0 = arith.cmpi eq, %arg2, %c0_i32 : i32
    %1 = arith.extui %0 : i1 to i32
    %c0_i32_0 = arith.constant 0 : i32
    %2 = arith.cmpi ne, %1, %c0_i32_0 : i32
    scf.if %2 {
      %cst_32 = arith.constant 0.000000e+00 : f32
      %36 = vector.broadcast %cst_32 : f32 to vector<1x1x1x1xf32>
      %c0_33 = arith.constant 0 : index
      %c0_34 = arith.constant 0 : index
      %c0_35 = arith.constant 0 : index
      %c0_36 = arith.constant 0 : index
      %37 = vector.load %arg6[%c0_33, %c0_34, %c0_35, %c0_36] : memref<1x1x1x1xf32, #tpu.memory_space<vmem>>, vector<1x1x1x1xf32>
      tpu.vector_store %arg6[%c0_33, %c0_34, %c0_35, %c0_36], %36 {strides = array<i32>} : memref<1x1x1x1xf32, #tpu.memory_space<vmem>>, vector<1x1x1x1xf32>,
      %cst_37 = arith.constant 0.000000e+00 : f32
      %38 = vector.broadcast %cst_37 : f32 to vector<1x1x1x1xf32>
      %c0_38 = arith.constant 0 : index
      %c0_39 = arith.constant 0 : index
      %c0_40 = arith.constant 0 : index
      %c0_41 = arith.constant 0 : index
      %39 = vector.load %arg7[%c0_38, %c0_39, %c0_40, %c0_41] : memref<1x1x1x1xf32, #tpu.memory_space<vmem>>, vector<1x1x1x1xf32>
      tpu.vector_store %arg7[%c0_38, %c0_39, %c0_40, %c0_41], %38 {strides = array<i32>} : memref<1x1x1x1xf32, #tpu.memory_space<vmem>>, vector<1x1x1x1xf32>,
    } else {
    }
    %c0 = arith.constant 0 : index
    %c0_1 = arith.constant 0 : index
    %c0_2 = arith.constant 0 : index
    %c0_3 = arith.constant 0 : index
    %3 = vector.load %arg5[%c0, %c0_1, %c0_2, %c0_3] : memref<1x1x32x128xi32, #tpu.memory_space<vmem>>, vector<1x1x32x128xi32>
    %4 = vector.shape_cast %3 : vector<1x1x32x128xi32> to vector<32x128xi32>
    %cst = arith.constant dense<0> : vector<32x128xi32>
    %5 = arith.cmpi ne, %4, %cst : vector<32x128xi32>
    %c0_4 = arith.constant 0 : index
    %c0_5 = arith.constant 0 : index
    %c0_6 = arith.constant 0 : index
    %c0_7 = arith.constant 0 : index
    %6 = vector.load %arg3[%c0_4, %c0_5, %c0_6, %c0_7] : memref<1x4x32x128xf32, #tpu.memory_space<vmem>>, vector<1x4x32x128xf32>
    %7 = vector.shape_cast %6 : vector<1x4x32x128xf32> to vector<4x32x128xf32>
    %c0_8 = arith.constant 0 : index
    %c0_9 = arith.constant 0 : index
    %c0_10 = arith.constant 0 : index
    %c0_11 = arith.constant 0 : index
    %8 = vector.load %arg4[%c0_8, %c0_9, %c0_10, %c0_11] : memref<1x4x32x128xf32, #tpu.memory_space<vmem>>, vector<1x4x32x128xf32>
    %9 = vector.shape_cast %8 : vector<1x4x32x128xf32> to vector<4x32x128xf32>
    %10 = arith.divf %9, %7 : vector<4x32x128xf32>
    %cst_12 = arith.constant 1.000000e+00 : f32
    %11 = vector.shape_cast %5 : vector<32x128xi1> to vector<1x32x128xi1>
    %12 = vector.broadcast %11 : vector<1x32x128xi1> to vector<4x32x128xi1>
    %13 = vector.broadcast %cst_12 : f32 to vector<4x32x128xf32>
    %14 = arith.select %12, %10, %13 : vector<4x32x128xi1>, vector<4x32x128xf32>
    %15 = math.log %14 : vector<4x32x128xf32>
    %c0_13 = arith.constant 0 : index
    %c0_14 = arith.constant 0 : index
    %c0_15 = arith.constant 0 : index
    %c0_16 = arith.constant 0 : index
    %16 = vector.load %arg6[%c0_13, %c0_14, %c0_15, %c0_16] : memref<1x1x1x1xf32, #tpu.memory_space<vmem>>, vector<1x1x1x1xf32>
    %17 = arith.mulf %15, %15 : vector<4x32x128xf32>
    %cst_17 = arith.constant dense<0.000000e+00> : vector<32x128xf32>
    %18 = vector.multi_reduction <add>, %17, %cst_17 [0] : vector<4x32x128xf32> to vector<32x128xf32>
    %19 = vector.shape_cast %18 : vector<32x128xf32> to vector<1x32x128xf32>
    %cst_18 = arith.constant dense<0.000000e+00> : vector<1xf32>
    %20 = vector.multi_reduction <add>, %19, %cst_18 [1, 2] : vector<1x32x128xf32> to vector<1xf32>
    %21 = vector.shape_cast %20 : vector<1xf32> to vector<1x1x1xf32>
    %22 = vector.extract %21[0, 0, 0] : f32 from vector<1x1x1xf32>
    %23 = vector.broadcast %22 : f32 to vector<1x1x1x1xf32>
    %24 = arith.addf %16, %23 : vector<1x1x1x1xf32>
    %c0_19 = arith.constant 0 : index
    %c0_20 = arith.constant 0 : index
    %c0_21 = arith.constant 0 : index
    %c0_22 = arith.constant 0 : index
    %25 = vector.load %arg6[%c0_19, %c0_20, %c0_21, %c0_22] : memref<1x1x1x1xf32, #tpu.memory_space<vmem>>, vector<1x1x1x1xf32>
    tpu.vector_store %arg6[%c0_19, %c0_20, %c0_21, %c0_22], %24 {strides = array<i32>} : memref<1x1x1x1xf32, #tpu.memory_space<vmem>>, vector<1x1x1x1xf32>,
    %c0_23 = arith.constant 0 : index
    %c0_24 = arith.constant 0 : index
    %c0_25 = arith.constant 0 : index
    %c0_26 = arith.constant 0 : index
    %26 = vector.load %arg7[%c0_23, %c0_24, %c0_25, %c0_26] : memref<1x1x1x1xf32, #tpu.memory_space<vmem>>, vector<1x1x1x1xf32>
    %27 = arith.extui %5 : vector<32x128xi1> to vector<32x128xi32>
    %28 = arith.sitofp %27 : vector<32x128xi32> to vector<32x128xf32>
    %29 = vector.shape_cast %28 : vector<32x128xf32> to vector<1x32x128xf32>
    %cst_27 = arith.constant dense<0.000000e+00> : vector<1xf32>
    %30 = vector.multi_reduction <add>, %29, %cst_27 [1, 2] : vector<1x32x128xf32> to vector<1xf32>
    %31 = vector.shape_cast %30 : vector<1xf32> to vector<1x1x1xf32>
    %32 = vector.extract %31[0, 0, 0] : f32 from vector<1x1x1xf32>
    %33 = vector.broadcast %32 : f32 to vector<1x1x1x1xf32>
    %34 = arith.addf %26, %33 : vector<1x1x1x1xf32>
    %c0_28 = arith.constant 0 : index
    %c0_29 = arith.constant 0 : index
    %c0_30 = arith.constant 0 : index
    %c0_31 = arith.constant 0 : index
    %35 = vector.load %arg7[%c0_28, %c0_29, %c0_30, %c0_31] : memref<1x1x1x1xf32, #tpu.memory_space<vmem>>, vector<1x1x1x1xf32>
    tpu.vector_store %arg7[%c0_28, %c0_29, %c0_30, %c0_31], %34 {strides = array<i32>} : memref<1x1x1x1xf32, #tpu.memory_space<vmem>>, vector<1x1x1x1xf32>,
    return
  }
  func.func @transform_0(%arg0: i32, %arg1: i32, %arg2: i32) -> (i32, i32, i32, i32) {
    %c1_i32 = arith.constant 1 : i32
    %0 = arith.muli %arg1, %c1_i32 : i32
    %1 = arith.addi %0, %arg2 : i32
    %c0_i32 = arith.constant 0 : i32
    %c0_i32_0 = arith.constant 0 : i32
    %c0_i32_1 = arith.constant 0 : i32
    return %arg0, %c0_i32, %1, %c0_i32_0 : i32, i32, i32, i32
  }
  func.func @transform_1(%arg0: i32, %arg1: i32, %arg2: i32) -> (i32, i32, i32, i32) {
    %c1_i32 = arith.constant 1 : i32
    %0 = arith.muli %arg1, %c1_i32 : i32
    %1 = arith.addi %0, %arg2 : i32
    %c0_i32 = arith.constant 0 : i32
    %c0_i32_0 = arith.constant 0 : i32
    %c0_i32_1 = arith.constant 0 : i32
    return %arg0, %c0_i32, %1, %c0_i32_0 : i32, i32, i32, i32
  }
  func.func @transform_2(%arg0: i32, %arg1: i32, %arg2: i32) -> (i32, i32, i32, i32) {
    %c1_i32 = arith.constant 1 : i32
    %0 = arith.muli %arg1, %c1_i32 : i32
    %1 = arith.addi %0, %arg2 : i32
    %c0_i32 = arith.constant 0 : i32
    %c0_i32_0 = arith.constant 0 : i32
    %c0_i32_1 = arith.constant 0 : i32
    return %arg0, %c0_i32, %1, %c0_i32_0 : i32, i32, i32, i32
  }
  func.func @transform_3(%arg0: i32, %arg1: i32, %arg2: i32) -> (i32, i32, i32, i32) {
    %c0_i32 = arith.constant 0 : i32
    %c0_i32_0 = arith.constant 0 : i32
    %c0_i32_1 = arith.constant 0 : i32
    return %arg0, %arg1, %c0_i32, %c0_i32_0 : i32, i32, i32, i32
  }
  func.func @transform_4(%arg0: i32, %arg1: i32, %arg2: i32) -> (i32, i32, i32, i32) {
    %c0_i32 = arith.constant 0 : i32
    %c0_i32_0 = arith.constant 0 : i32
    %c0_i32_1 = arith.constant 0 : i32
    return %arg0, %arg1, %c0_i32, %c0_i32_0 : i32, i32, i32, i32
  }
}

</mosaic_0001>

<llo_original>
// kernel: tpu_custom_call.1
$region0: #{tpu_custom_call.1}
  #allocation0 [shape = 'u32[]', space=smem, size = 0x4, offset = 0x4, fixed_abs, tag = 'smem constant byte address 0x4 - core index']
  #allocation1 [shape = 'u32[144,128]{1,0:T(1,128)}', space=vmem, size = 0x12000, scoped, tag = 'internal scratch']
  %s0 = inlined_call_operand.hbm [shape: f32[2,4,32,128], index: 0, kind: input, shape index: {}]
  %s1 = inlined_call_operand.hbm [shape: f32[2,4,32,128], index: 1, kind: input, shape index: {}]
  %s2 = inlined_call_operand.vmem [shape: s32[2,1,32,128], index: 2, kind: input, shape index: {}]
  %s3 = inlined_call_operand.vmem [shape: f32[2,1,1,1], index: 3, kind: output, shape index: {0}]
  %s4 = inlined_call_operand.vmem [shape: f32[2,1,1,1], index: 4, kind: output, shape index: {1}]
  %5 = xla_tuple %s3, %s4
  %s6 = sld [smem:[#allocation0]]
  $region65: #{tpu_custom_call.1} parent=0
    _
  %s8 = ssub.s32 1, %s6
  %s9 = scalar_select 0, %s8, %s6
  $region1: #{tpu_custom_call.1} parent=0
    #allocation2 [shape = 'u8[131072]{0}', space=vmem, size = 0x20000, scoped, tag = 'input window, operand 0']
    #allocation3 [shape = 's32[2]{0}', space=sflag, size = 0x8, scoped, tag = 'scoped memory for tpu_custom_call.1']
    #allocation4 [shape = 'u8[131072]{0}', space=vmem, size = 0x20000, scoped, tag = 'input window, operand 1']
    #allocation5 [shape = 's32[2]{0}', space=sflag, size = 0x8, scoped, tag = 'scoped memory for tpu_custom_call.1']
    %10 = vsyncpa [#allocation3], 0
    %s11 = scalar_lea.sflag [#allocation3], 1
    %12 = vsyncpa %s11, 0
    %13 = vsyncpa [#allocation5], 0
    %s14 = scalar_lea.sflag [#allocation5], 1
    %15 = vsyncpa %s14, 0
    loop: start=0, step=1, limit=4
    $region2: #{tpu_custom_call.1} parent=1 // loop_pre_header
      _
    $region3: #{tpu_custom_call.1} parent=1 // loop_header
      %s17 = sphi 0, %s21
      %p18 = scmp.ge.s32.totalorder %s17, 4
      %s24 = sphi 0, %s43
      %s25 = sphi 0, %s39
      %s26 = sphi 0, %s35
      %s27 = sphi 0, %s24
      %s28 = sphi 0, %s25
      %s29 = sphi 0, %s26
      %s30 = sphi 0, %s27
      %s31 = sphi 0, %s28
      %s32 = sphi 0, %s29
      %s50 = sphi 0, %s52
      %s53 = sphi 0, %s50
      %s54 = sphi 0, %s53
      %s70 = sphi 0, %s54
      %s80 = sphi 0, %s82
      %s83 = sphi 0, %s80
      %s84 = sphi 0, %s83
      %s100 = sphi 0, %s84
      %s110 = sphi 0, %s112
      %s113 = sphi 0, %s110
      %s114 = sphi 0, %s113
      %s130 = sphi 0, %s114
      %s138 = sphi 0, %s140
      %s141 = sphi 0, %s138
      %s142 = sphi 0, %s141
      %s158 = sphi 0, %s142
      %s166 = sphi 0, %s168
      %s169 = sphi 0, %s166
      %s170 = sphi 0, %s169
      %s186 = sphi 0, %s170
    $region4: #{tpu_custom_call.1} parent=1 // loop_header_branch
      %20 = sbr.rel (%p18) target = $region8
    $region5: #{tpu_custom_call.1} parent=1 // loop_body
      %s22 = ssub.s32 %s17, 1
      %s23 = ssub.s32 %s17, 2
      %s33 = sadd.s32 1, %s26
      %p34 = scmp.ge.s32.totalorder %s33, 1
      %s35 = scalar_select %p34, 0, %s33
      %s36 = sadd.s32 1, %s25
      %s37 = scalar_select %p34, %s36, %s25
      %p38 = scmp.ge.s32.totalorder %s37, 1
      %s39 = scalar_select %p38, 0, %s37
      %s40 = sadd.s32 1, %s24
      %s41 = scalar_select %p38, %s40, %s24
      %p42 = scmp.ge.s32.totalorder %s41, 2
      %s43 = scalar_select %p42, 0, %s41
      %s44 = sadd.s32 %s25, %s26
      %s45 = sadd.s32 %s39, %s35
      %s46 = ssub.s32 %s24, %s43
      %s47 = ssub.s32 %s44, %s45
      %s48 = sor.u32 %s46, %s47
      %p49 = scmp.eq.s32.totalorder %s48, 0
      %s51 = sadd.s32 %s50, 1
      %s52 = scalar_select %p49, %s50, %s51
      %p55 = pneg %p49
      %p56 = scmp.eq.s32.totalorder %s17, 1
      %p57 = por %p55, %p56
      %p58 = scmp.ne.s32.totalorder %s50, %s53
      %p59 = scmp.eq.s32.totalorder %s17, 0
      %p60 = por %p58, %p59
      %p61 = scmp.ne.s32.totalorder %s50, %s53
      %p62 = scmp.eq.s32.totalorder %s22, 1
      %p63 = por %p61, %p62
      %p64 = scmp.ne.s32.totalorder %s53, %s54
      %p65 = scmp.eq.s32.totalorder %s22, 0
      %p66 = por %p64, %p65
      %p67 = scmp.ne.s32.totalorder %s53, %s54
      %p68 = scmp.eq.s32.totalorder %s23, 1
      %p69 = por %p67, %p68
      %p71 = scmp.ne.s32.totalorder %s54, %s70
      %p72 = scmp.eq.s32.totalorder %s23, 0
      %p73 = por %p71, %p72
      %s74 = sadd.s32 %s25, %s26
      %s75 = sadd.s32 %s39, %s35
      %s76 = ssub.s32 %s24, %s43
      %s77 = ssub.s32 %s74, %s75
      %s78 = sor.u32 %s76, %s77
      %p79 = scmp.eq.s32.totalorder %s78, 0
      %s81 = sadd.s32 %s80, 1
      %s82 = scalar_select %p79, %s80, %s81
      %p85 = pneg %p79
      %p86 = scmp.eq.s32.totalorder %s17, 1
      %p87 = por %p85, %p86
      %p88 = scmp.ne.s32.totalorder %s80, %s83
      %p89 = scmp.eq.s32.totalorder %s17, 0
      %p90 = por %p88, %p89
      %p91 = scmp.ne.s32.totalorder %s80, %s83
      %p92 = scmp.eq.s32.totalorder %s22, 1
      %p93 = por %p91, %p92
      %p94 = scmp.ne.s32.totalorder %s83, %s84
      %p95 = scmp.eq.s32.totalorder %s22, 0
      %p96 = por %p94, %p95
      %p97 = scmp.ne.s32.totalorder %s83, %s84
      %p98 = scmp.eq.s32.totalorder %s23, 1
      %p99 = por %p97, %p98
      %p101 = scmp.ne.s32.totalorder %s84, %s100
      %p102 = scmp.eq.s32.totalorder %s23, 0
      %p103 = por %p101, %p102
      %s104 = sadd.s32 %s25, %s26
      %s105 = sadd.s32 %s39, %s35
      %s106 = ssub.s32 %s24, %s43
      %s107 = ssub.s32 %s104, %s105
      %s108 = sor.u32 %s106, %s107
      %p109 = scmp.eq.s32.totalorder %s108, 0
      %s111 = sadd.s32 %s110, 1
      %s112 = scalar_select %p109, %s110, %s111
      %p115 = pneg %p109
      %p116 = scmp.eq.s32.totalorder %s17, 1
      %p117 = por %p115, %p116
      %p118 = scmp.ne.s32.totalorder %s110, %s113
      %p119 = scmp.eq.s32.totalorder %s17, 0
      %p120 = por %p118, %p119
      %p121 = scmp.ne.s32.totalorder %s110, %s113
      %p122 = scmp.eq.s32.totalorder %s22, 1
      %p123 = por %p121, %p122
      %p124 = scmp.ne.s32.totalorder %s113, %s114
      %p125 = scmp.eq.s32.totalorder %s22, 0
      %p126 = por %p124, %p125
      %p127 = scmp.ne.s32.totalorder %s113, %s114
      %p128 = scmp.eq.s32.totalorder %s23, 1
      %p129 = por %p127, %p128
      %p131 = scmp.ne.s32.totalorder %s114, %s130
      %p132 = scmp.eq.s32.totalorder %s23, 0
      %p133 = por %p131, %p132
      %s134 = ssub.s32 %s24, %s43
      %s135 = ssub.s32 %s25, %s39
      %s136 = sor.u32 %s134, %s135
      %p137 = scmp.eq.s32.totalorder %s136, 0
      %s139 = sadd.s32 %s138, 1
      %s140 = scalar_select %p137, %s138, %s139
      %p143 = pneg %p137
      %p144 = scmp.eq.s32.totalorder %s17, 1
      %p145 = por %p143, %p144
      %p146 = scmp.ne.s32.totalorder %s138, %s141
      %p147 = scmp.eq.s32.totalorder %s17, 0
      %p148 = por %p146, %p147
      %p149 = scmp.ne.s32.totalorder %s138, %s141
      %p150 = scmp.eq.s32.totalorder %s22, 1
      %p151 = por %p149, %p150
      %p152 = scmp.ne.s32.totalorder %s141, %s142
      %p153 = scmp.eq.s32.totalorder %s22, 0
      %p154 = por %p152, %p153
      %p155 = scmp.ne.s32.totalorder %s141, %s142
      %p156 = scmp.eq.s32.totalorder %s23, 1
      %p157 = por %p155, %p156
      %p159 = scmp.ne.s32.totalorder %s142, %s158
      %p160 = scmp.eq.s32.totalorder %s23, 0
      %p161 = por %p159, %p160
      %s162 = ssub.s32 %s24, %s43
      %s163 = ssub.s32 %s25, %s39
      %s164 = sor.u32 %s162, %s163
      %p165 = scmp.eq.s32.totalorder %s164, 0
      %s167 = sadd.s32 %s166, 1
      %s168 = scalar_select %p165, %s166, %s167
      %p171 = pneg %p165
      %p172 = scmp.eq.s32.totalorder %s17, 1
      %p173 = por %p171, %p172
      %p174 = scmp.ne.s32.totalorder %s166, %s169
      %p175 = scmp.eq.s32.totalorder %s17, 0
      %p176 = por %p174, %p175
      %p177 = scmp.ne.s32.totalorder %s166, %s169
      %p178 = scmp.eq.s32.totalorder %s22, 1
      %p179 = por %p177, %p178
      %p180 = scmp.ne.s32.totalorder %s169, %s170
      %p181 = scmp.eq.s32.totalorder %s22, 0
      %p182 = por %p180, %p181
      %p183 = scmp.ne.s32.totalorder %s169, %s170
      %p184 = scmp.eq.s32.totalorder %s23, 1
      %p185 = por %p183, %p184
      %p187 = scmp.ne.s32.totalorder %s170, %s186
      %p188 = scmp.eq.s32.totalorder %s23, 0
      %p189 = por %p187, %p188
      %p190 = scmp.le.s32.totalorder 1, %s17
      %p191 = scmp.lt.s32.totalorder %s17, 3
      %p192 = pnand %p190, %p191
      %p193 = pneg %p192
      // Predicated region
      $region9: #{tpu_custom_call.1} parent=5 // pred_check
        _
      $region10: #{tpu_custom_call.1} parent=5 // pred_check_branch
        %195 = sbr.rel (%p192) target = $region12
      $region11: #{tpu_custom_call.1} parent=5 // pred_region
        %s196 = ssub.s32 %s17, 1
      $region12: #{tpu_custom_call.1} parent=5 // pred_fallthru
        _
      %p197 = scmp.lt.s32.totalorder %s17, 2
      // Predicated region
      $region13: #{tpu_custom_call.1} parent=5 // pred_check
        %p198 = pneg %p197
      $region14: #{tpu_custom_call.1} parent=5 // pred_check_branch
        %200 = sbr.rel (%p198) target = $region16
      $region15: #{tpu_custom_call.1} parent=5 // pred_region
        // Predicated region
        $region17: #{tpu_custom_call.1} parent=15 // pred_check
          %p201 = pneg %p60
        $region18: #{tpu_custom_call.1} parent=15 // pred_check_branch
          %203 = sbr.rel (%p201) target = $region20
        $region19: #{tpu_custom_call.1} parent=15 // pred_region
          %s204 = sand.u32 %s50, 1
          %s205 = scalar_lea.sflag [#allocation3], %s204
          %s206 = sand.u32 %s50, 1
          %s207 = smul.addr %s206, 128
          %s208 = scalar_lea.vmem [#allocation2], %s207
          %s209 = sadd.s32 %s25, %s26
          %s210 = smul.u32 4, %s209
          %s212 = ssub.s32 2048, 2048
          %213 = vsyncadd %s205, %s212
          %s214 = smul.addr %s24, 16
          %s215 = sadd.s32 %s210, %s214
          %s216 = smul.addr %s215, 128
          %s217 = scalar_lea.hbm %s0, %s216
          %s218 = sshll.u32 %s208, 4
          %s219 = int_to_ptr.vmem [resolvable:$true] %s218
          %224 = dma.hbm_to_vmem [thread:$0]  %s217, 2048, %s219, %s205, 128, 128, 8
        $region20: #{tpu_custom_call.1} parent=15 // pred_fallthru
          _
        // Predicated region
        $region21: #{tpu_custom_call.1} parent=15 // pred_check
          %p225 = pneg %p90
        $region22: #{tpu_custom_call.1} parent=15 // pred_check_branch
          %227 = sbr.rel (%p225) target = $region24
        $region23: #{tpu_custom_call.1} parent=15 // pred_region
          %s228 = sand.u32 %s80, 1
          %s229 = scalar_lea.sflag [#allocation5], %s228
          %s230 = sand.u32 %s80, 1
          %s231 = smul.addr %s230, 128
          %s232 = scalar_lea.vmem [#allocation4], %s231
          %s233 = sadd.s32 %s25, %s26
          %s234 = smul.u32 4, %s233
          %s236 = ssub.s32 2048, 2048
          %237 = vsyncadd %s229, %s236
          %s238 = smul.addr %s24, 16
          %s239 = sadd.s32 %s234, %s238
          %s240 = smul.addr %s239, 128
          %s241 = scalar_lea.hbm %s1, %s240
          %s242 = sshll.u32 %s232, 4
          %s243 = int_to_ptr.vmem [resolvable:$true] %s242
          %248 = dma.hbm_to_vmem [thread:$0]  %s241, 2048, %s243, %s229, 128, 128, 8
        $region24: #{tpu_custom_call.1} parent=15 // pred_fallthru
          _
        // Predicated region
        $region25: #{tpu_custom_call.1} parent=15 // pred_check
          %p249 = pneg %p120
        $region26: #{tpu_custom_call.1} parent=15 // pred_check_branch
          %251 = sbr.rel (%p249) target = $region28
        $region27: #{tpu_custom_call.1} parent=15 // pred_region
          %s252 = sadd.s32 %s25, %s26
          %s253 = smul.u32 4, %s252
          %p254 = scmp.lt.s32.totalorder %s24, 1
          %s255 = scalar_select %p254, %s24, 1
          %p256 = scmp.lt.s32.totalorder %s253, 3
          %s257 = scalar_select %p256, %s253, 3
          %s258 = smul.addr %s255, 4
          %s259 = sadd.s32 %s257, %s258
          %s260 = smul.addr %s259, 8
          %s261 = scalar_lea.vmem %s2, %s260
          %s262 = sadd.s32 %s25, %s26
          %s263 = smul.u32 4, %s262
        $region28: #{tpu_custom_call.1} parent=15 // pred_fallthru
          _
      $region16: #{tpu_custom_call.1} parent=5 // pred_fallthru
        _
      %p264 = scmp.le.s32.totalorder 1, %s17
      %p265 = scmp.lt.s32.totalorder %s17, 3
      %p266 = pnand %p264, %p265
      %p267 = pneg %p266
      // Predicated region
      $region29: #{tpu_custom_call.1} parent=5 // pred_check
        _
      $region30: #{tpu_custom_call.1} parent=5 // pred_check_branch
        %269 = sbr.rel (%p266) target = $region32
      $region31: #{tpu_custom_call.1} parent=5 // pred_region
        %s270 = ssub.s32 %s17, 1
        %s271 = sand.u32 %s53, 1
        %s272 = scalar_lea.sflag [#allocation3], %s271
        %s273 = sand.u32 %s53, 1
        %s274 = smul.addr %s273, 128
        %s275 = scalar_lea.vmem [#allocation2], %s274
        // Predicated region
        $region33: #{tpu_custom_call.1} parent=31 // pred_check
          %p276 = pneg %p66
        $region34: #{tpu_custom_call.1} parent=31 // pred_check_branch
          %278 = sbr.rel (%p276) target = $region36
        $region35: #{tpu_custom_call.1} parent=31 // pred_region
          %279 = dma.done %s272, 2048
        $region36: #{tpu_custom_call.1} parent=31 // pred_fallthru
          _
        %s280 = sand.u32 %s83, 1
        %s281 = scalar_lea.sflag [#allocation5], %s280
        %s282 = sand.u32 %s83, 1
        %s283 = smul.addr %s282, 128
        %s284 = scalar_lea.vmem [#allocation4], %s283
        // Predicated region
        $region37: #{tpu_custom_call.1} parent=31 // pred_check
          %p285 = pneg %p96
        $region38: #{tpu_custom_call.1} parent=31 // pred_check_branch
          %287 = sbr.rel (%p285) target = $region40
        $region39: #{tpu_custom_call.1} parent=31 // pred_region
          %288 = dma.done %s281, 2048
        $region40: #{tpu_custom_call.1} parent=31 // pred_fallthru
          _
        %s289 = sand.u32 %s53, 1
        %s290 = scalar_lea.sflag [#allocation3], %s289
        %s291 = sand.u32 %s53, 1
        %s292 = smul.addr %s291, 128
        %s293 = scalar_lea.vmem [#allocation2], %s292
        %p294 = pneg %p66
        %p295 = pneg %p63
        %s296 = sand.u32 %s83, 1
        %s297 = scalar_lea.sflag [#allocation5], %s296
        %s298 = sand.u32 %s83, 1
        %s299 = smul.addr %s298, 128
        %s300 = scalar_lea.vmem [#allocation4], %s299
        %p301 = pneg %p96
        %p302 = pneg %p93
        %s303 = sadd.s32 %s28, %s29
        %s304 = smul.u32 4, %s303
        %p305 = scmp.lt.s32.totalorder %s27, 1
        %s306 = scalar_select %p305, %s27, 1
        %p307 = scmp.lt.s32.totalorder %s304, 3
        %s308 = scalar_select %p307, %s304, 3
        %s309 = smul.addr %s306, 4
        %s310 = sadd.s32 %s308, %s309
        %s311 = smul.addr %s310, 8
        %s312 = scalar_lea.vmem %s2, %s311
        %p313 = pneg %p126
        %p314 = pneg %p123
        %p315 = pneg %p154
        %p316 = pneg %p151
        %p317 = scmp.lt.s32.totalorder %s27, 1
        %s318 = scalar_select %p317, %s27, 1
        %p319 = scmp.lt.s32.totalorder %s28, 0
        %s320 = scalar_select %p319, %s28, 0
        %s321 = sadd.s32 %s320, %s318
        %s322 = scalar_lea.vmem %s3, %s321
        %p323 = pneg %p182
        %p324 = pneg %p179
        %p325 = scmp.lt.s32.totalorder %s27, 1
        %s326 = scalar_select %p325, %s27, 1
        %p327 = scmp.lt.s32.totalorder %s28, 0
        %s328 = scalar_select %p327, %s28, 0
        %s329 = sadd.s32 %s328, %s326
        %s330 = scalar_lea.vmem %s4, %s329
        %s331 = sadd.s32 %s28, %s29
        %s332 = smul.u32 4, %s331
        %s333 = sadd.s32 %s28, %s29
        %s334 = smul.u32 4, %s333
        %s335 = sadd.s32 %s28, %s29
        %s336 = smul.u32 4, %s335
        %p337 = scmp.lt.s32.totalorder %s27, 1
        %s338 = scalar_select %p337, %s27, 1
        %p339 = scmp.lt.s32.totalorder %s336, 3
        %s340 = scalar_select %p339, %s336, 3
        %s341 = smul.addr %s338, 4
        %s342 = sadd.s32 %s340, %s341
        %s343 = smul.addr %s342, 8
        %s344 = scalar_lea.vmem %s2, %s343
        %s345 = sadd.s32 %s28, %s29
        %s346 = smul.u32 4, %s345
        %p347 = scmp.lt.s32.totalorder %s27, 1
        %s348 = scalar_select %p347, %s27, 1
        %p349 = scmp.lt.s32.totalorder %s28, 0
        %s350 = scalar_select %p349, %s28, 0
        %s351 = sadd.s32 %s350, %s348
        %s352 = scalar_lea.vmem %s3, %s351
        %p353 = scmp.lt.s32.totalorder %s27, 1
        %s354 = scalar_select %p353, %s27, 1
        %p355 = scmp.lt.s32.totalorder %s28, 0
        %s356 = scalar_select %p355, %s28, 0
        %s357 = sadd.s32 %s356, %s354
        %s358 = scalar_lea.vmem %s4, %s357
        %p359 = scmp.eq.s32.totalorder %s29, 0
        // Predicated region
        $region41: #{tpu_custom_call.1} parent=31 // pred_check
          %p360 = pneg %p359
        $region42: #{tpu_custom_call.1} parent=31 // pred_check_branch
          %362 = sbr.rel (%p360) target = $region44
        $region43: #{tpu_custom_call.1} parent=31 // pred_region
          %vm363 = vcmask 0
          %364 = vst.msk [vmem:[%s352] sm:$0x1] %vm363, 0.0
          %365 = vst.msk [vmem:[%s358] sm:$0x1] %vm363, 0.0
        $region44: #{tpu_custom_call.1} parent=31 // pred_fallthru
          _
        %v366 = vld [vmem:[%s344] sm:$0xff]
        %v367 = vld [vmem:[%s344 + $0x8] sm:$0xff]
        %v368 = vld [vmem:[%s344 + $0x10] sm:$0xff]
        %v369 = vld [vmem:[%s344 + $0x18] sm:$0xff]
        %vm370 = vcmp.ne.s32.totalorder %v366, 0
        %vm371 = vcmp.ne.s32.totalorder %v367, 0
        %vm372 = vcmp.ne.s32.totalorder %v368, 0
        %vm373 = vcmp.ne.s32.totalorder %v369, 0
        %v374 = vld [vmem:[%s275] sm:$0xff]
        %v375 = vld [vmem:[%s275 + $0x8] sm:$0xff]
        %v376 = vld [vmem:[%s275 + $0x10] sm:$0xff]
        %v377 = vld [vmem:[%s275 + $0x18] sm:$0xff]
        %v378 = vld [vmem:[%s275 + $0x20] sm:$0xff]
        %v379 = vld [vmem:[%s275 + $0x28] sm:$0xff]
        %v380 = vld [vmem:[%s275 + $0x30] sm:$0xff]
        %v381 = vld [vmem:[%s275 + $0x38] sm:$0xff]
        %v382 = vld [vmem:[%s275 + $0x40] sm:$0xff]
        %v383 = vld [vmem:[%s275 + $0x48] sm:$0xff]
        %v384 = vld [vmem:[%s275 + $0x50] sm:$0xff]
        %v385 = vld [vmem:[%s275 + $0x58] sm:$0xff]
        %v386 = vld [vmem:[%s275 + $0x60] sm:$0xff]
        %v387 = vld [vmem:[%s275 + $0x68] sm:$0xff]
        %v388 = vld [vmem:[%s275 + $0x70] sm:$0xff]
        %v389 = vld [vmem:[%s275 + $0x78] sm:$0xff]
        %v390 = vld [vmem:[%s284] sm:$0xff]
        %v391 = vld [vmem:[%s284 + $0x8] sm:$0xff]
        %v392 = vld [vmem:[%s284 + $0x10] sm:$0xff]
        %v393 = vld [vmem:[%s284 + $0x18] sm:$0xff]
        %v394 = vld [vmem:[%s284 + $0x20] sm:$0xff]
        %v395 = vld [vmem:[%s284 + $0x28] sm:$0xff]
        %v396 = vld [vmem:[%s284 + $0x30] sm:$0xff]
        %v397 = vld [vmem:[%s284 + $0x38] sm:$0xff]
        %v398 = vld [vmem:[%s284 + $0x40] sm:$0xff]
        %v399 = vld [vmem:[%s284 + $0x48] sm:$0xff]
        %v400 = vld [vmem:[%s284 + $0x50] sm:$0xff]
        %v401 = vld [vmem:[%s284 + $0x58] sm:$0xff]
        %v402 = vld [vmem:[%s284 + $0x60] sm:$0xff]
        %v403 = vld [vmem:[%s284 + $0x68] sm:$0xff]
        %v404 = vld [vmem:[%s284 + $0x70] sm:$0xff]
        %v405 = vld [vmem:[%s284 + $0x78] sm:$0xff]
        %v406 = vrcp.pop %v374
        %v407 = vmul.f32 %v390, %v406
        %v408 = vrcp.pop %v375
        %v409 = vmul.f32 %v391, %v408
        %v410 = vrcp.pop %v376
        %v411 = vmul.f32 %v392, %v410
        %v412 = vrcp.pop %v377
        %v413 = vmul.f32 %v393, %v412
        %v414 = vrcp.pop %v378
        %v415 = vmul.f32 %v394, %v414
        %v416 = vrcp.pop %v379
        %v417 = vmul.f32 %v395, %v416
        %v418 = vrcp.pop %v380
        %v419 = vmul.f32 %v396, %v418
        %v420 = vrcp.pop %v381
        %v421 = vmul.f32 %v397, %v420
        %v422 = vrcp.pop %v382
        %v423 = vmul.f32 %v398, %v422
        %v424 = vrcp.pop %v383
        %v425 = vmul.f32 %v399, %v424
        %v426 = vrcp.pop %v384
        %v427 = vmul.f32 %v400, %v426
        %v428 = vrcp.pop %v385
        %v429 = vmul.f32 %v401, %v428
        %v430 = vrcp.pop %v386
        %v431 = vmul.f32 %v402, %v430
        %v432 = vrcp.pop %v387
        %v433 = vmul.f32 %v403, %v432
        %v434 = vrcp.pop %v388
        %v435 = vmul.f32 %v404, %v434
        %v436 = vrcp.pop %v389
        %v437 = vmul.f32 %v405, %v436
        %v438 = vsel %vm370, 1, 0
        %v439 = vsel %vm371, 1, 0
        %v440 = vsel %vm372, 1, 0
        %v441 = vsel %vm373, 1, 0
        %vm442 = vcmp.eq.s32.totalorder %v438, 1
        %vm443 = vcmp.eq.s32.totalorder %v439, 1
        %vm444 = vcmp.eq.s32.totalorder %v440, 1
        %vm445 = vcmp.eq.s32.totalorder %v441, 1
        %v446 = vsel %vm442, %v407, 1.0
        %v447 = vsel %vm443, %v409, 1.0
        %v448 = vsel %vm444, %v411, 1.0
        %v449 = vsel %vm445, %v413, 1.0
        %v450 = vsel %vm442, %v415, 1.0
        %v451 = vsel %vm443, %v417, 1.0
        %v452 = vsel %vm444, %v419, 1.0
        %v453 = vsel %vm445, %v421, 1.0
        %v454 = vsel %vm442, %v423, 1.0
        %v455 = vsel %vm443, %v425, 1.0
        %v456 = vsel %vm444, %v427, 1.0
        %v457 = vsel %vm445, %v429, 1.0
        %v458 = vsel %vm442, %v431, 1.0
        %v459 = vsel %vm443, %v433, 1.0
        %v460 = vsel %vm444, %v435, 1.0
        %v461 = vsel %vm445, %v437, 1.0
        %v462 = vlog2.pop %v446
        %v463 = vmul.f32 %v462, 0.6931472
        %v464 = vlog2.pop %v447
        %v465 = vmul.f32 %v464, 0.6931472
        %v466 = vlog2.pop %v448
        %v467 = vmul.f32 %v466, 0.6931472
        %v468 = vlog2.pop %v449
        %v469 = vmul.f32 %v468, 0.6931472
        %v470 = vlog2.pop %v450
        %v471 = vmul.f32 %v470, 0.6931472
        %v472 = vlog2.pop %v451
        %v473 = vmul.f32 %v472, 0.6931472
        %v474 = vlog2.pop %v452
        %v475 = vmul.f32 %v474, 0.6931472
        %v476 = vlog2.pop %v453
        %v477 = vmul.f32 %v476, 0.6931472
        %v478 = vlog2.pop %v454
        %v479 = vmul.f32 %v478, 0.6931472
        %v480 = vlog2.pop %v455
        %v481 = vmul.f32 %v480, 0.6931472
        %v482 = vlog2.pop %v456
        %v483 = vmul.f32 %v482, 0.6931472
        %v484 = vlog2.pop %v457
        %v485 = vmul.f32 %v484, 0.6931472
        %v486 = vlog2.pop %v458
        %v487 = vmul.f32 %v486, 0.6931472
        %v488 = vlog2.pop %v459
        %v489 = vmul.f32 %v488, 0.6931472
        %v490 = vlog2.pop %v460
        %v491 = vmul.f32 %v490, 0.6931472
        %v492 = vlog2.pop %v461
        %v493 = vmul.f32 %v492, 0.6931472
        %v494 = vld [vmem:[%s352] sm:$0x1]
        %v495 = vmul.f32 %v463, %v463
        %v496 = vmul.f32 %v465, %v465
        %v497 = vmul.f32 %v467, %v467
        %v498 = vmul.f32 %v469, %v469
        %v499 = vmul.f32 %v471, %v471
        %v500 = vmul.f32 %v473, %v473
        %v501 = vmul.f32 %v475, %v475
        %v502 = vmul.f32 %v477, %v477
        %v503 = vmul.f32 %v479, %v479
        %v504 = vmul.f32 %v481, %v481
        %v505 = vmul.f32 %v483, %v483
        %v506 = vmul.f32 %v485, %v485
        %v507 = vmul.f32 %v487, %v487
        %v508 = vmul.f32 %v489, %v489
        %v509 = vmul.f32 %v491, %v491
        %v510 = vmul.f32 %v493, %v493
        %v511 = vadd.f32 %v495, %v499
        %v512 = vadd.f32 %v511, %v503
        %v513 = vadd.f32 %v512, %v507
        %v514 = vadd.f32 %v496, %v500
        %v515 = vadd.f32 %v514, %v504
        %v516 = vadd.f32 %v515, %v508
        %v517 = vadd.f32 %v497, %v501
        %v518 = vadd.f32 %v517, %v505
        %v519 = vadd.f32 %v518, %v509
        %v520 = vadd.f32 %v498, %v502
        %v521 = vadd.f32 %v520, %v506
        %v522 = vadd.f32 %v521, %v510
        %v523 = vadd.f32 %v513, %v516
        %v524 = vadd.f32 %v523, %v519
        %v525 = vadd.f32 %v524, %v522
        %526 = vadd.xlane.f32.xlu0 %v525
        %v527 = vpop.xlane.xlu0 %526
        %v528 = vrot.slane %v527, 4
        %v529 = vadd.f32 %v527, %v528
        %v530 = vrot.slane %v529, 2
        %v531 = vadd.f32 %v529, %v530
        %v532 = vrot.slane %v531, 1
        %v533 = vadd.f32 %v531, %v532
        %s534 = vtos %v533
        %v535 = vstv %s534
        %v536 = vadd.f32 %v494, %v535
        %vm537 = vcmask 0
        %538 = vst.msk [vmem:[%s352] sm:$0x1] %vm537, %v536
        %v539 = vld [vmem:[%s358] sm:$0x1]
        %v540 = vcvt.s32.f32 %v438
        %v541 = vcvt.s32.f32 %v439
        %v542 = vcvt.s32.f32 %v440
        %v543 = vcvt.s32.f32 %v441
        %v544 = vadd.f32 %v540, %v541
        %v545 = vadd.f32 %v544, %v542
        %v546 = vadd.f32 %v545, %v543
        %547 = vadd.xlane.f32.xlu0 %v546
        %v548 = vpop.xlane.xlu0 %547
        %v549 = vrot.slane %v548, 4
        %v550 = vadd.f32 %v548, %v549
        %v551 = vrot.slane %v550, 2
        %v552 = vadd.f32 %v550, %v551
        %v553 = vrot.slane %v552, 1
        %v554 = vadd.f32 %v552, %v553
        %s555 = vtos %v554
        %v556 = vstv %s555
        %v557 = vadd.f32 %v539, %v556
        %558 = vst.msk [vmem:[%s358] sm:$0x1] %vm537, %v557
        %p559 = scmp.lt.s32.totalorder %s27, 1
        %s560 = scalar_select %p559, %s27, 1
        %p561 = scmp.lt.s32.totalorder %s28, 0
        %s562 = scalar_select %p561, %s28, 0
        %s563 = sadd.s32 %s562, %s560
        %s564 = scalar_lea.vmem %s3, %s563
        %p565 = scmp.lt.s32.totalorder %s27, 1
        %s566 = scalar_select %p565, %s27, 1
        %p567 = scmp.lt.s32.totalorder %s28, 0
        %s568 = scalar_select %p567, %s28, 0
        %s569 = sadd.s32 %s568, %s566
        %s570 = scalar_lea.vmem %s4, %s569
        // Predicated region
        $region45: #{tpu_custom_call.1} parent=31 // pred_check
          %p571 = pneg %p151
        $region46: #{tpu_custom_call.1} parent=31 // pred_check_branch
          %573 = sbr.rel (%p571) target = $region48
        $region47: #{tpu_custom_call.1} parent=31 // pred_region
          _
        $region48: #{tpu_custom_call.1} parent=31 // pred_fallthru
          _
        // Predicated region
        $region49: #{tpu_custom_call.1} parent=31 // pred_check
          %p574 = pneg %p179
        $region50: #{tpu_custom_call.1} parent=31 // pred_check_branch
          %576 = sbr.rel (%p574) target = $region52
        $region51: #{tpu_custom_call.1} parent=31 // pred_region
          _
        $region52: #{tpu_custom_call.1} parent=31 // pred_fallthru
          _
      $region32: #{tpu_custom_call.1} parent=5 // pred_fallthru
        _
      %p577 = scmp.le.s32.totalorder 2, %s17
      // Predicated region
      $region53: #{tpu_custom_call.1} parent=5 // pred_check
        %p578 = pneg %p577
      $region54: #{tpu_custom_call.1} parent=5 // pred_check_branch
        %580 = sbr.rel (%p578) target = $region56
      $region55: #{tpu_custom_call.1} parent=5 // pred_region
        %s581 = ssub.s32 %s17, 2
        // Predicated region
        $region57: #{tpu_custom_call.1} parent=55 // pred_check
          %p582 = pneg %p157
        $region58: #{tpu_custom_call.1} parent=55 // pred_check_branch
          %584 = sbr.rel (%p582) target = $region60
        $region59: #{tpu_custom_call.1} parent=55 // pred_region
          %p585 = scmp.lt.s32.totalorder %s30, 1
          %s586 = scalar_select %p585, %s30, 1
          %p587 = scmp.lt.s32.totalorder %s31, 0
          %s588 = scalar_select %p587, %s31, 0
          %s589 = sadd.s32 %s588, %s586
          %s590 = scalar_lea.vmem %s3, %s589
        $region60: #{tpu_custom_call.1} parent=55 // pred_fallthru
          _
        // Predicated region
        $region61: #{tpu_custom_call.1} parent=55 // pred_check
          %p591 = pneg %p185
        $region62: #{tpu_custom_call.1} parent=55 // pred_check_branch
          %593 = sbr.rel (%p591) target = $region64
        $region63: #{tpu_custom_call.1} parent=55 // pred_region
          %p594 = scmp.lt.s32.totalorder %s30, 1
          %s595 = scalar_select %p594, %s30, 1
          %p596 = scmp.lt.s32.totalorder %s31, 0
          %s597 = scalar_select %p596, %s31, 0
          %s598 = sadd.s32 %s597, %s595
          %s599 = scalar_lea.vmem %s4, %s598
        $region64: #{tpu_custom_call.1} parent=55 // pred_fallthru
          _
      $region56: #{tpu_custom_call.1} parent=5 // pred_fallthru
        _
    $region6: #{tpu_custom_call.1} parent=1 // loop_footer
      %s21 = sadd.s32 1, %s17
    $region7: #{tpu_custom_call.1} parent=1 // loop_footer_branch
      %16 = sbr.rel target = $region3
    $region8: #{tpu_custom_call.1} parent=1 // loop_exit
      _
    %600 = vsyncpa [#allocation3], 1
    %s601 = scalar_lea.sflag [#allocation3], 1
    %602 = vsyncpa %s601, 1
    %603 = vsyncpa [#allocation5], 1
    %s604 = scalar_lea.sflag [#allocation5], 1
    %605 = vsyncpa %s604, 1

</llo_original>
